<compile_context>
chip_gen: v6e
topology: v6e:2x2x1
jax: 0.10.0
libtpu: 0.0.40
codegen_flags: <defaults>
</compile_context>

<pallas_src>
import jax
import jax.numpy as jnp
from jax.experimental import pallas as pl
from jax.experimental.pallas import tpu as pltpu


EINSUM_OPT = "bij,bjk->bik"   # the `einsum_opt` passed to Parallel_einsum.__init__

_LANE = 128
# per-batch (A + B + out) byte budget below which we pack whole batches per step
_SMALL_PER_BATCH_BYTES = 4 * 1024 * 1024
# target per-step operand footprint for the batch-packed path (x2 for double
# buffering still sits far under the explicit vmem_limit below)
_SMALL_STEP_TARGET_BYTES = 8 * 1024 * 1024
# default tile caps for the tiled path (512x512 out tile, tk up to 1024)
_TM, _TN, _TK = 512, 512, 512
_TK_DEEP = 1024          # used when J is very deep


def _round_up(x, m):
    return ((x + m - 1) // m) * m


def _sublane(itemsize):
    # dtype-native sublane packing: f32 -> 8, bf16 -> 16, int8/fp8 -> 32
    return {4: 8, 2: 16, 1: 32}.get(int(itemsize), 8)


def _num_tensorcores():
    """Best-effort TensorCore count (1 on v5e/v6e, 2 on v7x)."""
    try:
        info = pltpu.get_tpu_info()
        for name in ("num_cores", "tensor_cores_per_chip", "cores_per_chip",
                     "num_tensorcores"):
            v = getattr(info, name, None)
            if v:
                return max(1, int(v))
    except Exception:
        pass
    try:
        d = jax.devices()[0]
        for name in ("num_cores", "core_count"):
            v = getattr(d, name, None)
            if v:
                return max(1, int(v))
    except Exception:
        pass
    return 1


def _vmem_limit_bytes():
    """Explicit scoped-VMEM request: ~3/4 of physical, capped at 64 MiB.

    v5e/v6e (128 MiB physical) -> 64 MiB; v7x (64 MiB physical) -> 48 MiB.
    """
    cap = 128 << 20
    try:
        info = pltpu.get_tpu_info()
        for name in ("vmem_capacity_bytes", "vmem_size_bytes"):
            v = getattr(info, name, None)
            if v:
                cap = int(v)
                break
    except Exception:
        pass
    return int(min(64 << 20, (cap * 3) // 4))


_NUM_TC = _num_tensorcores()
_VMEM_LIMIT = _vmem_limit_bytes()


def _cost(B, I, J, K, itemsize):
    # Advisory hint so XLA schedules surrounding ops sensibly.
    return pl.CostEstimate(
        flops=int(2 * B * I * J * K),
        transcendentals=0,
        bytes_accessed=int(itemsize * (B * I * J + B * J * K + B * I * K)),
    )


# --------------------------- small-matrix path ------------------------------

def _bmm_batch_block_kernel(a_ref, b_ref, o_ref):
    # a_ref: (TB, I, J), b_ref: (TB, J, K), o_ref: (TB, I, K)
    o_ref[...] = jnp.einsum(
        "bij,bjk->bik", a_ref[...], b_ref[...],
        preferred_element_type=jnp.float32,
    ).astype(o_ref.dtype)


def _bmm_batch_blocked(a, b):
    """einsum('bij,bjk->bik') for small per-batch matrices: TB batches / step."""
    B, I, J = a.shape
    _, _, K = b.shape
    out_dtype = jnp.result_type(a.dtype, b.dtype)
    itemsize = jnp.dtype(out_dtype).itemsize

    # Lane-dense stores matter most for very narrow outputs: pad K only when
    # it is below one lane group.  K >= 128 but unaligned just takes a masked
    # tail store, avoiding an extra HBM pass for jnp.pad + output slice.
    if K < _LANE:
        Kp = _LANE
        b_in = jnp.pad(b, ((0, 0), (0, 0), (0, Kp - K)))
    else:
        Kp = K
        b_in = b

    per_batch = (I * J + J * Kp + I * Kp) * itemsize
    tb = max(1, min(B, _SMALL_STEP_TARGET_BYTES // max(per_batch, 1)))

    # Only split across grid steps when there is >1 TensorCore to feed
    # (megacore); then target >= 2 steps per core so the pipeline can hide
    # each core's DMA behind the previous step's compute.
    if _NUM_TC >= 2 and B >= 2:
        target_steps = min(B, 2 * _NUM_TC)
        if pl.cdiv(B, tb) < target_steps:
            tb = pl.cdiv(B, target_steps)

    # NOTE: when B % tb != 0 the last grid step reads OOB batches (garbage) and
    # computes garbage for them; this is correct because Pallas drops the OOB
    # output writes.  Do not change the out_spec to anything that accumulates
    # or revisits without re-checking this.
    out = pl.pallas_call(
        _bmm_batch_block_kernel,
        out_shape=jax.ShapeDtypeStruct((B, I, Kp), out_dtype),
        grid_spec=pltpu.PrefetchScalarGridSpec(
            num_scalar_prefetch=0,
            grid=(pl.cdiv(B, tb),),
            in_specs=[
                pl.BlockSpec((tb, I, J), lambda bb: (bb, 0, 0)),
                pl.BlockSpec((tb, J, Kp), lambda bb: (bb, 0, 0)),
            ],
            out_specs=pl.BlockSpec((tb, I, Kp), lambda bb: (bb, 0, 0)),
        ),
        compiler_params=pltpu.CompilerParams(
            dimension_semantics=("parallel",),
            vmem_limit_bytes=_VMEM_LIMIT,
        ),
        cost_estimate=_cost(B, I, J, Kp, itemsize),
    )(a, b_in)
    return out if Kp == K else out[:, :, :K]


# --------------------------- large-matrix path ------------------------------

def _bmm_tiled_kernel_accout(a_ref, b_ref, o_ref):
    # float32 output: accumulate directly into the resident output block
    # (out_spec ignores j, so the block stays in VMEM across the reduction).
    @pl.when(pl.program_id(3) == 0)
    def _():
        o_ref[...] = jnp.zeros_like(o_ref)

    o_ref[...] += jnp.dot(
        a_ref[...], b_ref[...], preferred_element_type=jnp.float32
    )


def _bmm_tiled_kernel_scratch(a_ref, b_ref, o_ref, acc_ref):
    # non-f32 output: accumulate in an f32 VMEM scratch, cast on the last step.
    @pl.when(pl.program_id(3) == 0)
    def _():
        acc_ref[...] = jnp.zeros_like(acc_ref)

    acc_ref[...] += jnp.dot(
        a_ref[...], b_ref[...], preferred_element_type=jnp.float32
    )

    @pl.when(pl.program_id(3) == pl.num_programs(3) - 1)
    def _():
        o_ref[...] = acc_ref[...].astype(o_ref.dtype)


def _bmm_tiled(a, b, *, tm_cap=_TM, tn_cap=_TN, tk_cap=None):
    """einsum('bij,bjk->bik') tiled over (B, I/tm, K/tn, J/tk)."""
    B, I, J = a.shape
    _, _, K = b.shape
    out_dtype = jnp.result_type(a.dtype, b.dtype)
    itemsize = jnp.dtype(out_dtype).itemsize

    if tk_cap is None:
        tk_cap = _TK_DEEP if J >= 4096 else _TK

    # Output tile: 512x512 (full MXU passes on v6e/v7x 256x256, 4x128x128 on
    # v5e).  Small dims clamp to dtype-aligned full extent; any excess over the
    # real dim is an OOB region whose output writes Pallas drops, so I and K
    # are never zero-padded on the wrapper side.
    sub = _sublane(a.dtype.itemsize)
    tm = min(tm_cap, _round_up(I, sub))
    tn = min(tn_cap, _round_up(K, _LANE))

    # Reduction dim: OOB garbage would corrupt the sum, so it must be exact.
    # If J fits in one tile, use the full (unaligned) dim as the block; else
    # pad only to the next multiple of 128 and pick the largest 128-multiple
    # tile <= tk_cap that divides it.
    if J <= tk_cap:
        tk = J
        Jp = J
    else:
        Jp = _round_up(J, _LANE)
        tk = _LANE
        for cand in range(tk_cap, _LANE - 1, -_LANE):
            if Jp % cand == 0:
                tk = cand
                break
    if Jp != J:
        a = jnp.pad(a, ((0, 0), (0, Jp - J), (0, 0)))
        b = jnp.pad(b, ((0, 0), (0, Jp - J), (0, 0)))

    grid = (B, pl.cdiv(I, tm), pl.cdiv(K, tn), Jp // tk)   # reduction axis last

    if out_dtype == jnp.float32:
        kernel = _bmm_tiled_kernel_accout
        scratch = []
    else:
        kernel = _bmm_tiled_kernel_scratch
        scratch = [pltpu.VMEM((tm, tn), jnp.float32)]

    return pl.pallas_call(
        kernel,
        out_shape=jax.ShapeDtypeStruct((B, I, K), out_dtype),
        grid_spec=pltpu.PrefetchScalarGridSpec(
            num_scalar_prefetch=0,
            grid=grid,
            in_specs=[
                pl.BlockSpec((pl.Squeezed(), tm, tk), lambda bb, i, k, j: (bb, i, j)),
                pl.BlockSpec((pl.Squeezed(), tk, tn), lambda bb, i, k, j: (bb, j, k)),
            ],
            out_specs=pl.BlockSpec((pl.Squeezed(), tm, tn), lambda bb, i, k, j: (bb, i, k)),
            scratch_shapes=scratch,
        ),
        compiler_params=pltpu.CompilerParams(
            dimension_semantics=("parallel", "parallel", "parallel", "arbitrary"),
            vmem_limit_bytes=_VMEM_LIMIT,
        ),
        cost_estimate=_cost(B, I, J, K, itemsize),
    )(a, b)


# ------------------------------- dispatcher ---------------------------------

def _pallas_batched_einsum(a, b):
    """Compute einsum('bij,bjk->bik', a, b) with a Pallas TPU kernel."""
    B, I, J = a.shape
    B2, J2, K = b.shape
    assert B == B2 and J == J2, "operand shapes inconsistent with 'bij,bjk->bik'"

    per_batch_bytes = (I * J + J * K + I * K) * a.dtype.itemsize
    if per_batch_bytes <= _SMALL_PER_BATCH_BYTES:
        return _bmm_batch_blocked(a, b)
    return _bmm_tiled(a, b)


class ParallelEinsum:
    """JAX/Pallas port of Parallel_einsum: __call__(*operands) -> (einsum(opt, *operands),)."""

    def __init__(self, einsum_opt):
        self.opt = einsum_opt

    def __call__(self, *operands):
        if self.opt == EINSUM_OPT and len(operands) == 2:
            out = _pallas_batched_einsum(*operands)
        else:
            # TODO(synk): general N-operand einsum equations fall back to XLA einsum
            # (no single generic Pallas kernel for arbitrary contraction strings).
            out = jnp.einsum(self.opt, *operands)
        return (out,)


if __name__ == "__main__":
    key = jax.random.PRNGKey(0)
    ks = jax.random.split(key, 8)
    module = ParallelEinsum(EINSUM_OPT)

    def _check(out, ref, atol, rtol, name):
        out = jax.block_until_ready(out)
        assert out.shape == ref.shape, f"{name}: shape {out.shape} vs {ref.shape}"
        ok = jnp.allclose(out.astype(jnp.float32), ref.astype(jnp.float32),
                          atol=atol, rtol=rtol)
        assert bool(ok), f"{name}: mismatch vs reference einsum"

    # 1) small path, 128-aligned K (B=8 exercises multi-batch-per-step packing)
    B, I, J, K = 8, 16, 32, 128
    a = jax.random.normal(ks[0], (B, I, J), dtype=jnp.float32)
    b = jax.random.normal(ks[1], (B, J, K), dtype=jnp.float32)
    (out,) = module(a, b)
    _check(out, jnp.einsum(EINSUM_OPT, a, b), 1e-4, 1e-4, "small/aligned")

    # 2) small path, K < 128 (lane pad + slice branch)
    B, I, J, K = 4, 16, 24, 96
    a = jax.random.normal(ks[2], (B, I, J), dtype=jnp.float32)
    b = jax.random.normal(ks[3], (B, J, K), dtype=jnp.float32)
    (out,) = module(a, b)
    _check(out, jnp.einsum(EINSUM_OPT, a, b), 1e-4, 1e-4, "small/narrowK")

    # 3) tiled path (called directly at small shapes), f32 accumulate-into-output,
    #    unaligned I/K tails handled by dropped OOB writes, single reduction step.
    a = jax.random.normal(ks[4], (2, 24, 40), dtype=jnp.float32)
    b = jax.random.normal(ks[5], (2, 40, 136), dtype=jnp.float32)
    out = _bmm_tiled(a, b)
    _check(out, jnp.einsum(EINSUM_OPT, a, b), 1e-4, 1e-4, "tiled/f32/1step")

    # 4) tiled path with a multi-step reduction (tk_cap override) — f32 direct
    #    accumulation and the bf16 scratch-accumulator variant.
    a = jax.random.normal(ks[6], (2, 16, 256), dtype=jnp.float32)
    b = jax.random.normal(ks[7], (2, 256, 128), dtype=jnp.float32)
    out = _bmm_tiled(a, b, tk_cap=128)
    ref = jnp.einsum(EINSUM_OPT, a, b)
    _check(out, ref, 1e-4, 1e-4, "tiled/f32/2step")

    a16, b16 = a.astype(jnp.bfloat16), b.astype(jnp.bfloat16)
    out16 = _bmm_tiled(a16, b16, tk_cap=128)
    ref16 = jnp.einsum(EINSUM_OPT, a16.astype(jnp.float32), b16.astype(jnp.float32))
    _check(out16, ref16, 0.5, 5e-2, "tiled/bf16/2step")

    print("KERNEL_OK")
</pallas_src>

<mosaic_0001>
module attributes {stable_mosaic.version = 11 : i64} {
  func.func @_bmm_batch_block_kernel(%arg0: i32, %arg1: memref<8x16x32xf32, #tpu.memory_space<vmem>>, %arg2: memref<8x32x128xf32, #tpu.memory_space<vmem>>, %arg3: memref<8x16x128xf32, #tpu.memory_space<vmem>>) attributes {dimension_semantics = [#tpu.dimension_semantics<parallel>], iteration_bounds = array<i64: 1>, scalar_prefetch = 0 : i64, scratch_operands = 0 : i64, tpu.core_type = #tpu.core_type<tc>, window_params = [{transform_indices = @transform_0, window_bounds = array<i64: 8, 16, 32>}, {transform_indices = @transform_1, window_bounds = array<i64: 8, 32, 128>}, {transform_indices = @transform_2, window_bounds = array<i64: 8, 16, 128>}]} {
    %c0 = arith.constant 0 : index
    %c0_0 = arith.constant 0 : index
    %c0_1 = arith.constant 0 : index
    %0 = vector.load %arg1[%c0, %c0_0, %c0_1] : memref<8x16x32xf32, #tpu.memory_space<vmem>>, vector<8x16x32xf32>
    %c0_2 = arith.constant 0 : index
    %c0_3 = arith.constant 0 : index
    %c0_4 = arith.constant 0 : index
    %1 = vector.load %arg2[%c0_2, %c0_3, %c0_4] : memref<8x32x128xf32, #tpu.memory_space<vmem>>, vector<8x32x128xf32>
    "tpu.trace_start"() <{level = 10 : i32, message = "bij,bjk->bik"}> : () -> ()
    %cst = arith.constant dense<0.000000e+00> : vector<8x16x128xf32>
    %2 = tpu.matmul %0, %1, %cst {dimension_numbers = #tpu.dot_dimension_numbers<[2], [1], [1], [2], [0, 0, 0, 1, 1, 2], [0], [0]>} : vector<8x16x32xf32>, vector<8x32x128xf32>, vector<8x16x128xf32> -> vector<8x16x128xf32>
    "tpu.trace_stop"() : () -> ()
    %c0_5 = arith.constant 0 : index
    %c0_6 = arith.constant 0 : index
    %c0_7 = arith.constant 0 : index
    %3 = vector.load %arg3[%c0_5, %c0_6, %c0_7] : memref<8x16x128xf32, #tpu.memory_space<vmem>>, vector<8x16x128xf32>
    tpu.vector_store %arg3[%c0_5, %c0_6, %c0_7], %2 {strides = array<i32>} : memref<8x16x128xf32, #tpu.memory_space<vmem>>, vector<8x16x128xf32>,
    return
  }
  func.func @transform_0(%arg0: i32) -> (i32, i32, i32) {
    %c0_i32 = arith.constant 0 : i32
    %c0_i32_0 = arith.constant 0 : i32
    %c0_i32_1 = arith.constant 0 : i32
    return %arg0, %c0_i32, %c0_i32_0 : i32, i32, i32
  }
  func.func @transform_1(%arg0: i32) -> (i32, i32, i32) {
    %c0_i32 = arith.constant 0 : i32
    %c0_i32_0 = arith.constant 0 : i32
    %c0_i32_1 = arith.constant 0 : i32
    return %arg0, %c0_i32, %c0_i32_0 : i32, i32, i32
  }
  func.func @transform_2(%arg0: i32) -> (i32, i32, i32) {
    %c0_i32 = arith.constant 0 : i32
    %c0_i32_0 = arith.constant 0 : i32
    %c0_i32_1 = arith.constant 0 : i32
    return %arg0, %c0_i32, %c0_i32_0 : i32, i32, i32
  }
}

</mosaic_0001>

<llo_original>
// kernel: tpu_custom_call.1
$region0: #{tpu_custom_call.1}
  #allocation0 [shape = 'u32[]', space=smem, size = 0x4, offset = 0x4, fixed_abs, tag = 'smem constant byte address 0x4 - core index']
  #allocation1 [shape = 'u32[144,128]{1,0:T(1,128)}', space=vmem, size = 0x12000, scoped, tag = 'internal scratch']
  %s0 = inlined_call_operand.hbm [shape: f32[8,16,32], index: 0, kind: input, shape index: {}]
  %s1 = inlined_call_operand.hbm [shape: f32[8,32,128], index: 1, kind: input, shape index: {}]
  %s2 = inlined_call_operand.hbm [shape: f32[8,16,128], index: 2, kind: output, shape index: {}]
  %s3 = sld [smem:[#allocation0]]
  $region26: #{tpu_custom_call.1} parent=0
    _
  %s5 = ssub.s32 1, %s3
  %s6 = scalar_select 0, %s5, %s3
  $region1: #{tpu_custom_call.1} parent=0
    #allocation2 [shape = 'u8[65536]{0}', space=vmem, size = 0x10000, scoped, tag = 'input window, operand 0, single buffered']
    #allocation3 [shape = 's32[1]{0}', space=sflag, size = 0x4, scoped, tag = 'scoped memory for tpu_custom_call.1']
    #allocation4 [shape = 's32[1]{0}', space=sflag, size = 0x4, scoped, tag = 'scoped memory for tpu_custom_call.1']
    #allocation5 [shape = 'u8[131072]{0}', space=vmem, size = 0x20000, scoped, tag = 'input window, operand 1, single buffered']
    #allocation6 [shape = 's32[1]{0}', space=sflag, size = 0x4, scoped, tag = 'scoped memory for tpu_custom_call.1']
    #allocation7 [shape = 'u8[65536]{0}', space=vmem, size = 0x10000, scoped, tag = 'output window, operand 0, single buffered']
    %7 = vsyncpa [#allocation3], 0
    %8 = vsyncpa [#allocation6], 0
    %9 = vsyncpa [#allocation4], 0
    // Predicated region
    $region2: #{tpu_custom_call.1} parent=1 // pred_check
      _
    $region3: #{tpu_custom_call.1} parent=1 // pred_check_branch
      %11 = sbr.rel (0) target = $region5
    $region4: #{tpu_custom_call.1} parent=1 // pred_region
      %s13 = ssub.s32 2048, 2048
      %14 = vsyncadd [#allocation3], %s13
      %s15 = sshll.u32 [#allocation2], 4
      %s16 = int_to_ptr.vmem [resolvable:$true] %s15
      %21 = dma.hbm_to_vmem [thread:$0]  %s0, 2048, %s16, [#allocation3], 128, 128, 8
    $region5: #{tpu_custom_call.1} parent=1 // pred_fallthru
      _
    // Predicated region
    $region6: #{tpu_custom_call.1} parent=1 // pred_check
      _
    $region7: #{tpu_custom_call.1} parent=1 // pred_check_branch
      %23 = sbr.rel (0) target = $region9
    $region8: #{tpu_custom_call.1} parent=1 // pred_region
      %s25 = ssub.s32 4096, 4096
      %26 = vsyncadd [#allocation6], %s25
      %s27 = sshll.u32 [#allocation5], 4
      %s28 = int_to_ptr.vmem [resolvable:$true] %s27
      %33 = dma.hbm_to_vmem [thread:$0]  %s1, 4096, %s28, [#allocation6], 128, 128, 8
    $region9: #{tpu_custom_call.1} parent=1 // pred_fallthru
      _
    // Predicated region
    $region10: #{tpu_custom_call.1} parent=1 // pred_check
      _
    $region11: #{tpu_custom_call.1} parent=1 // pred_check_branch
      %35 = sbr.rel (0) target = $region13
    $region12: #{tpu_custom_call.1} parent=1 // pred_region
      %36 = dma.done [#allocation3], 2048
    $region13: #{tpu_custom_call.1} parent=1 // pred_fallthru
      _
    // Predicated region
    $region14: #{tpu_custom_call.1} parent=1 // pred_check
      _
    $region15: #{tpu_custom_call.1} parent=1 // pred_check_branch
      %38 = sbr.rel (0) target = $region17
    $region16: #{tpu_custom_call.1} parent=1 // pred_region
      %39 = dma.done [#allocation6], 4096
    $region17: #{tpu_custom_call.1} parent=1 // pred_fallthru
      _
    %v40 = vld [vmem:[#allocation2] sm:$0xff]
    %v41 = vld [vmem:[#allocation2 + $0x8] sm:$0xff]
    %v42 = vld [vmem:[#allocation2 + $0x10] sm:$0xff]
    %v43 = vld [vmem:[#allocation2 + $0x18] sm:$0xff]
    %v44 = vld [vmem:[#allocation2 + $0x20] sm:$0xff]
    %v45 = vld [vmem:[#allocation2 + $0x28] sm:$0xff]
    %v46 = vld [vmem:[#allocation2 + $0x30] sm:$0xff]
    %v47 = vld [vmem:[#allocation2 + $0x38] sm:$0xff]
    %v48 = vld [vmem:[#allocation2 + $0x40] sm:$0xff]
    %v49 = vld [vmem:[#allocation2 + $0x48] sm:$0xff]
    %v50 = vld [vmem:[#allocation2 + $0x50] sm:$0xff]
    %v51 = vld [vmem:[#allocation2 + $0x58] sm:$0xff]
    %v52 = vld [vmem:[#allocation2 + $0x60] sm:$0xff]
    %v53 = vld [vmem:[#allocation2 + $0x68] sm:$0xff]
    %v54 = vld [vmem:[#allocation2 + $0x70] sm:$0xff]
    %v55 = vld [vmem:[#allocation2 + $0x78] sm:$0xff]
    %v56 = vld [vmem:[#allocation5] sm:$0xff]
    %v57 = vld [vmem:[#allocation5 + $0x8] sm:$0xff]
    %v58 = vld [vmem:[#allocation5 + $0x10] sm:$0xff]
    %v59 = vld [vmem:[#allocation5 + $0x18] sm:$0xff]
    %v60 = vld [vmem:[#allocation5 + $0x20] sm:$0xff]
    %v61 = vld [vmem:[#allocation5 + $0x28] sm:$0xff]
    %v62 = vld [vmem:[#allocation5 + $0x30] sm:$0xff]
    %v63 = vld [vmem:[#allocation5 + $0x38] sm:$0xff]
    %v64 = vld [vmem:[#allocation5 + $0x40] sm:$0xff]
    %v65 = vld [vmem:[#allocation5 + $0x48] sm:$0xff]
    %v66 = vld [vmem:[#allocation5 + $0x50] sm:$0xff]
    %v67 = vld [vmem:[#allocation5 + $0x58] sm:$0xff]
    %v68 = vld [vmem:[#allocation5 + $0x60] sm:$0xff]
    %v69 = vld [vmem:[#allocation5 + $0x68] sm:$0xff]
    %v70 = vld [vmem:[#allocation5 + $0x70] sm:$0xff]
    %v71 = vld [vmem:[#allocation5 + $0x78] sm:$0xff]
    %v72 = vld [vmem:[#allocation5 + $0x80] sm:$0xff]
    %v73 = vld [vmem:[#allocation5 + $0x88] sm:$0xff]
    %v74 = vld [vmem:[#allocation5 + $0x90] sm:$0xff]
    %v75 = vld [vmem:[#allocation5 + $0x98] sm:$0xff]
    %v76 = vld [vmem:[#allocation5 + $0xa0] sm:$0xff]
    %v77 = vld [vmem:[#allocation5 + $0xa8] sm:$0xff]
    %v78 = vld [vmem:[#allocation5 + $0xb0] sm:$0xff]
    %v79 = vld [vmem:[#allocation5 + $0xb8] sm:$0xff]
    %v80 = vld [vmem:[#allocation5 + $0xc0] sm:$0xff]
    %v81 = vld [vmem:[#allocation5 + $0xc8] sm:$0xff]
    %v82 = vld [vmem:[#allocation5 + $0xd0] sm:$0xff]
    %v83 = vld [vmem:[#allocation5 + $0xd8] sm:$0xff]
    %v84 = vld [vmem:[#allocation5 + $0xe0] sm:$0xff]
    %v85 = vld [vmem:[#allocation5 + $0xe8] sm:$0xff]
    %v86 = vld [vmem:[#allocation5 + $0xf0] sm:$0xff]
    %v87 = vld [vmem:[#allocation5 + $0xf8] sm:$0xff]
    %vm88 = vcmask 261120
    %v90 = vsel %vm88, %v40, 0
    %v93 = vsel %vm88, %v41, 0
    %95 = vmatprep.subr.mxu0 0.0
    %96 = vmatpush1.msra.mxu0 0.0
    %97 = vmatprep.subr.mxu0 0.0
    %98 = vmatpush1.msra.mxu0 0.0
    %99 = vmatprep.subr.mxu0 0.0
    %100 = vmatpush1.msra.mxu0 0.0
    %101 = vmatprep.subr.mxu0 0.0
    %102 = vmatpush1.msra.mxu0 0.0
    %103 = vmatprep.subr.mxu0 0.0
    %104 = vmatpush1.msra.mxu0 0.0
    %105 = vmatprep.subr.mxu0 0.0
    %106 = vmatpush1.msra.mxu0 0.0
    %107 = vmatprep.subr.mxu0 0.0
    %108 = vmatpush1.msra.mxu0 0.0
    %109 = vmatprep.subr.mxu0 0.0
    %110 = vmatpush1.msra.mxu0 0.0
    %111 = vmatprep.subr.mxu0 0.0
    %112 = vmatpush1.msra.mxu0 0.0
    %113 = vmatprep.subr.mxu0 0.0
    %114 = vmatpush1.msra.mxu0 0.0
    %115 = vmatprep.subr.mxu0 0.0
    %116 = vmatpush1.msra.mxu0 0.0
    %117 = vmatprep.subr.mxu0 0.0
    %118 = vmatpush1.msra.mxu0 0.0
    %119 = vmatprep.subr.mxu0 0.0
    %120 = vmatpush1.msra.mxu0 %v59
    %121 = vmatprep.subr.mxu0 0.0
    %122 = vmatpush1.msra.mxu0 %v58
    %123 = vmatprep.subr.mxu0 0.0
    %124 = vmatpush1.msra.mxu0 %v57
    %125 = vmatprep.subr.mxu0 0.0
    %126 = vmatpush1.msra.mxu0 %v56
    %127 = vmatprep.subr.mxu0 0.0
    %128 = vmatpush2.msra.mxu0 0.0
    %129 = vmatprep.subr.mxu0 0.0
    %130 = vmatpush2.msra.mxu0 0.0
    %131 = vmatprep.subr.mxu0 0.0
    %132 = vmatpush2.msra.mxu0 0.0
    %133 = vmatprep.subr.mxu0 0.0
    %134 = vmatpush2.msra.mxu0 0.0
    %135 = vmatprep.subr.mxu0 0.0
    %136 = vmatpush2.msra.mxu0 0.0
    %137 = vmatprep.subr.mxu0 0.0
    %138 = vmatpush2.msra.mxu0 0.0
    %139 = vmatprep.subr.mxu0 0.0
    %140 = vmatpush2.msra.mxu0 0.0
    %141 = vmatprep.subr.mxu0 0.0
    %142 = vmatpush2.msra.mxu0 0.0
    %143 = vmatprep.subr.mxu0 0.0
    %144 = vmatpush2.msra.mxu0 0.0
    %145 = vmatprep.subr.mxu0 0.0
    %146 = vmatpush2.msra.mxu0 0.0
    %147 = vmatprep.subr.mxu0 0.0
    %148 = vmatpush2.msra.mxu0 0.0
    %149 = vmatprep.subr.mxu0 0.0
    %150 = vmatpush2.msra.mxu0 0.0
    %151 = vmatprep.subr.mxu0 0.0
    %152 = vmatpush2.msra.mxu0 0.0
    %153 = vmatprep.subr.mxu0 0.0
    %154 = vmatpush2.msra.mxu0 0.0
    %155 = vmatprep.subr.mxu0 0.0
    %156 = vmatpush2.msra.mxu0 0.0
    %157 = vmatprep.subr.mxu0 0.0
    %158 = vmatpush2.msra.mxu0 0.0
    %159 = vmatprep.mubr.f32.mxu0 0.0
    %160 = vmatmul.mubr.f32.gmra.mxu0 %v90
    %v161 = vpop.f32.mrf.mxu0
    %v162 = vadd.f32 0.0, %v161
    %v163 = vpop.f32.mrf.mxu0
    %164 = vmatprep.mubr.f32.mxu0 0.0
    %165 = vmatmul.mubr.f32.gmra.mxu0 %v93
    %v166 = vpop.f32.mrf.mxu0
    %v167 = vadd.f32 0.0, %v166
    %v168 = vpop.f32.mrf.mxu0
    %169 = vdwg.mxu0
    %v171 = vsel %vm88, %v42, 0
    %v174 = vsel %vm88, %v43, 0
    %176 = vmatprep.subr.mxu0 0.0
    %177 = vmatpush1.msra.mxu0 0.0
    %178 = vmatprep.subr.mxu0 0.0
    %179 = vmatpush1.msra.mxu0 0.0
    %180 = vmatprep.subr.mxu0 0.0
    %181 = vmatpush1.msra.mxu0 0.0
    %182 = vmatprep.subr.mxu0 0.0
    %183 = vmatpush1.msra.mxu0 0.0
    %184 = vmatprep.subr.mxu0 0.0
    %185 = vmatpush1.msra.mxu0 0.0
    %186 = vmatprep.subr.mxu0 0.0
    %187 = vmatpush1.msra.mxu0 0.0
    %188 = vmatprep.subr.mxu0 0.0
    %189 = vmatpush1.msra.mxu0 0.0
    %190 = vmatprep.subr.mxu0 0.0
    %191 = vmatpush1.msra.mxu0 0.0
    %192 = vmatprep.subr.mxu0 0.0
    %193 = vmatpush1.msra.mxu0 0.0
    %194 = vmatprep.subr.mxu0 0.0
    %195 = vmatpush1.msra.mxu0 0.0
    %196 = vmatprep.subr.mxu0 0.0
    %197 = vmatpush1.msra.mxu0 0.0
    %198 = vmatprep.subr.mxu0 0.0
    %199 = vmatpush1.msra.mxu0 0.0
    %200 = vmatprep.subr.mxu0 0.0
    %201 = vmatpush1.msra.mxu0 %v63
    %202 = vmatprep.subr.mxu0 0.0
    %203 = vmatpush1.msra.mxu0 %v62
    %204 = vmatprep.subr.mxu0 0.0
    %205 = vmatpush1.msra.mxu0 %v61
    %206 = vmatprep.subr.mxu0 0.0
    %207 = vmatpush1.msra.mxu0 %v60
    %208 = vmatprep.subr.mxu0 0.0
    %209 = vmatpush2.msra.mxu0 0.0
    %210 = vmatprep.subr.mxu0 0.0
    %211 = vmatpush2.msra.mxu0 0.0
    %212 = vmatprep.subr.mxu0 0.0
    %213 = vmatpush2.msra.mxu0 0.0
    %214 = vmatprep.subr.mxu0 0.0
    %215 = vmatpush2.msra.mxu0 0.0
    %216 = vmatprep.subr.mxu0 0.0
    %217 = vmatpush2.msra.mxu0 0.0
    %218 = vmatprep.subr.mxu0 0.0
    %219 = vmatpush2.msra.mxu0 0.0
    %220 = vmatprep.subr.mxu0 0.0
    %221 = vmatpush2.msra.mxu0 0.0
    %222 = vmatprep.subr.mxu0 0.0
    %223 = vmatpush2.msra.mxu0 0.0
    %224 = vmatprep.subr.mxu0 0.0
    %225 = vmatpush2.msra.mxu0 0.0
    %226 = vmatprep.subr.mxu0 0.0
    %227 = vmatpush2.msra.mxu0 0.0
    %228 = vmatprep.subr.mxu0 0.0
    %229 = vmatpush2.msra.mxu0 0.0
    %230 = vmatprep.subr.mxu0 0.0
    %231 = vmatpush2.msra.mxu0 0.0
    %232 = vmatprep.subr.mxu0 0.0
    %233 = vmatpush2.msra.mxu0 0.0
    %234 = vmatprep.subr.mxu0 0.0
    %235 = vmatpush2.msra.mxu0 0.0
    %236 = vmatprep.subr.mxu0 0.0
    %237 = vmatpush2.msra.mxu0 0.0
    %238 = vmatprep.subr.mxu0 0.0
    %239 = vmatpush2.msra.mxu0 0.0
    %240 = vmatprep.mubr.f32.mxu0 0.0
    %241 = vmatmul.mubr.f32.gmra.mxu0 %v171
    %v242 = vpop.f32.mrf.mxu0
    %v243 = vadd.f32 0.0, %v242
    %v244 = vpop.f32.mrf.mxu0
    %245 = vmatprep.mubr.f32.mxu0 0.0
    %246 = vmatmul.mubr.f32.gmra.mxu0 %v174
    %v247 = vpop.f32.mrf.mxu0
    %v248 = vadd.f32 0.0, %v247
    %v249 = vpop.f32.mrf.mxu0
    %250 = vdwg.mxu0
    %v252 = vsel %vm88, %v44, 0
    %v255 = vsel %vm88, %v45, 0
    %257 = vmatprep.subr.mxu0 0.0
    %258 = vmatpush1.msra.mxu0 0.0
    %259 = vmatprep.subr.mxu0 0.0
    %260 = vmatpush1.msra.mxu0 0.0
    %261 = vmatprep.subr.mxu0 0.0
    %262 = vmatpush1.msra.mxu0 0.0
    %263 = vmatprep.subr.mxu0 0.0
    %264 = vmatpush1.msra.mxu0 0.0
    %265 = vmatprep.subr.mxu0 0.0
    %266 = vmatpush1.msra.mxu0 0.0
    %267 = vmatprep.subr.mxu0 0.0
    %268 = vmatpush1.msra.mxu0 0.0
    %269 = vmatprep.subr.mxu0 0.0
    %270 = vmatpush1.msra.mxu0 0.0
    %271 = vmatprep.subr.mxu0 0.0
    %272 = vmatpush1.msra.mxu0 0.0
    %273 = vmatprep.subr.mxu0 0.0
    %274 = vmatpush1.msra.mxu0 0.0
    %275 = vmatprep.subr.mxu0 0.0
    %276 = vmatpush1.msra.mxu0 0.0
    %277 = vmatprep.subr.mxu0 0.0
    %278 = vmatpush1.msra.mxu0 0.0
    %279 = vmatprep.subr.mxu0 0.0
    %280 = vmatpush1.msra.mxu0 0.0
    %281 = vmatprep.subr.mxu0 0.0
    %282 = vmatpush1.msra.mxu0 %v67
    %283 = vmatprep.subr.mxu0 0.0
    %284 = vmatpush1.msra.mxu0 %v66
    %285 = vmatprep.subr.mxu0 0.0
    %286 = vmatpush1.msra.mxu0 %v65
    %287 = vmatprep.subr.mxu0 0.0
    %288 = vmatpush1.msra.mxu0 %v64
    %289 = vmatprep.subr.mxu0 0.0
    %290 = vmatpush2.msra.mxu0 0.0
    %291 = vmatprep.subr.mxu0 0.0
    %292 = vmatpush2.msra.mxu0 0.0
    %293 = vmatprep.subr.mxu0 0.0
    %294 = vmatpush2.msra.mxu0 0.0
    %295 = vmatprep.subr.mxu0 0.0
    %296 = vmatpush2.msra.mxu0 0.0
    %297 = vmatprep.subr.mxu0 0.0
    %298 = vmatpush2.msra.mxu0 0.0
    %299 = vmatprep.subr.mxu0 0.0
    %300 = vmatpush2.msra.mxu0 0.0
    %301 = vmatprep.subr.mxu0 0.0
    %302 = vmatpush2.msra.mxu0 0.0
    %303 = vmatprep.subr.mxu0 0.0
    %304 = vmatpush2.msra.mxu0 0.0
    %305 = vmatprep.subr.mxu0 0.0
    %306 = vmatpush2.msra.mxu0 0.0
    %307 = vmatprep.subr.mxu0 0.0
    %308 = vmatpush2.msra.mxu0 0.0
    %309 = vmatprep.subr.mxu0 0.0
    %310 = vmatpush2.msra.mxu0 0.0
    %311 = vmatprep.subr.mxu0 0.0
    %312 = vmatpush2.msra.mxu0 0.0
    %313 = vmatprep.subr.mxu0 0.0
    %314 = vmatpush2.msra.mxu0 0.0
    %315 = vmatprep.subr.mxu0 0.0
    %316 = vmatpush2.msra.mxu0 0.0
    %317 = vmatprep.subr.mxu0 0.0
    %318 = vmatpush2.msra.mxu0 0.0
    %319 = vmatprep.subr.mxu0 0.0
    %320 = vmatpush2.msra.mxu0 0.0
    %321 = vmatprep.mubr.f32.mxu0 0.0
    %322 = vmatmul.mubr.f32.gmra.mxu0 %v252
    %v323 = vpop.f32.mrf.mxu0
    %v324 = vadd.f32 0.0, %v323
    %v325 = vpop.f32.mrf.mxu0
    %326 = vmatprep.mubr.f32.mxu0 0.0
    %327 = vmatmul.mubr.f32.gmra.mxu0 %v255
    %v328 = vpop.f32.mrf.mxu0
    %v329 = vadd.f32 0.0, %v328
    %v330 = vpop.f32.mrf.mxu0
    %331 = vdwg.mxu0
    %v333 = vsel %vm88, %v46, 0
    %v336 = vsel %vm88, %v47, 0
    %338 = vmatprep.subr.mxu0 0.0
    %339 = vmatpush1.msra.mxu0 0.0
    %340 = vmatprep.subr.mxu0 0.0
    %341 = vmatpush1.msra.mxu0 0.0
    %342 = vmatprep.subr.mxu0 0.0
    %343 = vmatpush1.msra.mxu0 0.0
    %344 = vmatprep.subr.mxu0 0.0
    %345 = vmatpush1.msra.mxu0 0.0
    %346 = vmatprep.subr.mxu0 0.0
    %347 = vmatpush1.msra.mxu0 0.0
    %348 = vmatprep.subr.mxu0 0.0
    %349 = vmatpush1.msra.mxu0 0.0
    %350 = vmatprep.subr.mxu0 0.0
    %351 = vmatpush1.msra.mxu0 0.0
    %352 = vmatprep.subr.mxu0 0.0
    %353 = vmatpush1.msra.mxu0 0.0
    %354 = vmatprep.subr.mxu0 0.0
    %355 = vmatpush1.msra.mxu0 0.0
    %356 = vmatprep.subr.mxu0 0.0
    %357 = vmatpush1.msra.mxu0 0.0
    %358 = vmatprep.subr.mxu0 0.0
    %359 = vmatpush1.msra.mxu0 0.0
    %360 = vmatprep.subr.mxu0 0.0
    %361 = vmatpush1.msra.mxu0 0.0
    %362 = vmatprep.subr.mxu0 0.0
    %363 = vmatpush1.msra.mxu0 %v71
    %364 = vmatprep.subr.mxu0 0.0
    %365 = vmatpush1.msra.mxu0 %v70
    %366 = vmatprep.subr.mxu0 0.0
    %367 = vmatpush1.msra.mxu0 %v69
    %368 = vmatprep.subr.mxu0 0.0
    %369 = vmatpush1.msra.mxu0 %v68
    %370 = vmatprep.subr.mxu0 0.0
    %371 = vmatpush2.msra.mxu0 0.0
    %372 = vmatprep.subr.mxu0 0.0
    %373 = vmatpush2.msra.mxu0 0.0
    %374 = vmatprep.subr.mxu0 0.0
    %375 = vmatpush2.msra.mxu0 0.0
    %376 = vmatprep.subr.mxu0 0.0
    %377 = vmatpush2.msra.mxu0 0.0
    %378 = vmatprep.subr.mxu0 0.0
    %379 = vmatpush2.msra.mxu0 0.0
    %380 = vmatprep.subr.mxu0 0.0
    %381 = vmatpush2.msra.mxu0 0.0
    %382 = vmatprep.subr.mxu0 0.0
    %383 = vmatpush2.msra.mxu0 0.0
    %384 = vmatprep.subr.mxu0 0.0
    %385 = vmatpush2.msra.mxu0 0.0
    %386 = vmatprep.subr.mxu0 0.0
    %387 = vmatpush2.msra.mxu0 0.0
    %388 = vmatprep.subr.mxu0 0.0
    %389 = vmatpush2.msra.mxu0 0.0
    %390 = vmatprep.subr.mxu0 0.0
    %391 = vmatpush2.msra.mxu0 0.0
    %392 = vmatprep.subr.mxu0 0.0
    %393 = vmatpush2.msra.mxu0 0.0
    %394 = vmatprep.subr.mxu0 0.0
    %395 = vmatpush2.msra.mxu0 0.0
    %396 = vmatprep.subr.mxu0 0.0
    %397 = vmatpush2.msra.mxu0 0.0
    %398 = vmatprep.subr.mxu0 0.0
    %399 = vmatpush2.msra.mxu0 0.0
    %400 = vmatprep.subr.mxu0 0.0
    %401 = vmatpush2.msra.mxu0 0.0
    %402 = vmatprep.mubr.f32.mxu0 0.0
    %403 = vmatmul.mubr.f32.gmra.mxu0 %v333
    %v404 = vpop.f32.mrf.mxu0
    %v405 = vadd.f32 0.0, %v404
    %v406 = vpop.f32.mrf.mxu0
    %407 = vmatprep.mubr.f32.mxu0 0.0
    %408 = vmatmul.mubr.f32.gmra.mxu0 %v336
    %v409 = vpop.f32.mrf.mxu0
    %v410 = vadd.f32 0.0, %v409
    %v411 = vpop.f32.mrf.mxu0
    %412 = vdwg.mxu0
    %v414 = vsel %vm88, %v48, 0
    %v417 = vsel %vm88, %v49, 0
    %419 = vmatprep.subr.mxu0 0.0
    %420 = vmatpush1.msra.mxu0 0.0
    %421 = vmatprep.subr.mxu0 0.0
    %422 = vmatpush1.msra.mxu0 0.0
    %423 = vmatprep.subr.mxu0 0.0
    %424 = vmatpush1.msra.mxu0 0.0
    %425 = vmatprep.subr.mxu0 0.0
    %426 = vmatpush1.msra.mxu0 0.0
    %427 = vmatprep.subr.mxu0 0.0
    %428 = vmatpush1.msra.mxu0 0.0
    %429 = vmatprep.subr.mxu0 0.0
    %430 = vmatpush1.msra.mxu0 0.0
    %431 = vmatprep.subr.mxu0 0.0
    %432 = vmatpush1.msra.mxu0 0.0
    %433 = vmatprep.subr.mxu0 0.0
    %434 = vmatpush1.msra.mxu0 0.0
    %435 = vmatprep.subr.mxu0 0.0
    %436 = vmatpush1.msra.mxu0 0.0
    %437 = vmatprep.subr.mxu0 0.0
    %438 = vmatpush1.msra.mxu0 0.0
    %439 = vmatprep.subr.mxu0 0.0
    %440 = vmatpush1.msra.mxu0 0.0
    %441 = vmatprep.subr.mxu0 0.0
    %442 = vmatpush1.msra.mxu0 0.0
    %443 = vmatprep.subr.mxu0 0.0
    %444 = vmatpush1.msra.mxu0 %v75
    %445 = vmatprep.subr.mxu0 0.0
    %446 = vmatpush1.msra.mxu0 %v74
    %447 = vmatprep.subr.mxu0 0.0
    %448 = vmatpush1.msra.mxu0 %v73
    %449 = vmatprep.subr.mxu0 0.0
    %450 = vmatpush1.msra.mxu0 %v72
    %451 = vmatprep.subr.mxu0 0.0
    %452 = vmatpush2.msra.mxu0 0.0
    %453 = vmatprep.subr.mxu0 0.0
    %454 = vmatpush2.msra.mxu0 0.0
    %455 = vmatprep.subr.mxu0 0.0
    %456 = vmatpush2.msra.mxu0 0.0
    %457 = vmatprep.subr.mxu0 0.0
    %458 = vmatpush2.msra.mxu0 0.0
    %459 = vmatprep.subr.mxu0 0.0
    %460 = vmatpush2.msra.mxu0 0.0
    %461 = vmatprep.subr.mxu0 0.0
    %462 = vmatpush2.msra.mxu0 0.0
    %463 = vmatprep.subr.mxu0 0.0
    %464 = vmatpush2.msra.mxu0 0.0
    %465 = vmatprep.subr.mxu0 0.0
    %466 = vmatpush2.msra.mxu0 0.0
    %467 = vmatprep.subr.mxu0 0.0
    %468 = vmatpush2.msra.mxu0 0.0
    %469 = vmatprep.subr.mxu0 0.0
    %470 = vmatpush2.msra.mxu0 0.0
    %471 = vmatprep.subr.mxu0 0.0
    %472 = vmatpush2.msra.mxu0 0.0
    %473 = vmatprep.subr.mxu0 0.0
    %474 = vmatpush2.msra.mxu0 0.0
    %475 = vmatprep.subr.mxu0 0.0
    %476 = vmatpush2.msra.mxu0 0.0
    %477 = vmatprep.subr.mxu0 0.0
    %478 = vmatpush2.msra.mxu0 0.0
    %479 = vmatprep.subr.mxu0 0.0
    %480 = vmatpush2.msra.mxu0 0.0
    %481 = vmatprep.subr.mxu0 0.0
    %482 = vmatpush2.msra.mxu0 0.0
    %483 = vmatprep.mubr.f32.mxu0 0.0
    %484 = vmatmul.mubr.f32.gmra.mxu0 %v414
    %v485 = vpop.f32.mrf.mxu0
    %v486 = vadd.f32 0.0, %v485
    %v487 = vpop.f32.mrf.mxu0
    %488 = vmatprep.mubr.f32.mxu0 0.0
    %489 = vmatmul.mubr.f32.gmra.mxu0 %v417
    %v490 = vpop.f32.mrf.mxu0
    %v491 = vadd.f32 0.0, %v490
    %v492 = vpop.f32.mrf.mxu0
    %493 = vdwg.mxu0
    %v495 = vsel %vm88, %v50, 0
    %v498 = vsel %vm88, %v51, 0
    %500 = vmatprep.subr.mxu0 0.0
    %501 = vmatpush1.msra.mxu0 0.0
    %502 = vmatprep.subr.mxu0 0.0
    %503 = vmatpush1.msra.mxu0 0.0
    %504 = vmatprep.subr.mxu0 0.0
    %505 = vmatpush1.msra.mxu0 0.0
    %506 = vmatprep.subr.mxu0 0.0
    %507 = vmatpush1.msra.mxu0 0.0
    %508 = vmatprep.subr.mxu0 0.0
    %509 = vmatpush1.msra.mxu0 0.0
    %510 = vmatprep.subr.mxu0 0.0
    %511 = vmatpush1.msra.mxu0 0.0
    %512 = vmatprep.subr.mxu0 0.0
    %513 = vmatpush1.msra.mxu0 0.0
    %514 = vmatprep.subr.mxu0 0.0
    %515 = vmatpush1.msra.mxu0 0.0
    %516 = vmatprep.subr.mxu0 0.0
    %517 = vmatpush1.msra.mxu0 0.0
    %518 = vmatprep.subr.mxu0 0.0
    %519 = vmatpush1.msra.mxu0 0.0
    %520 = vmatprep.subr.mxu0 0.0
    %521 = vmatpush1.msra.mxu0 0.0
    %522 = vmatprep.subr.mxu0 0.0
    %523 = vmatpush1.msra.mxu0 0.0
    %524 = vmatprep.subr.mxu0 0.0
    %525 = vmatpush1.msra.mxu0 %v79
    %526 = vmatprep.subr.mxu0 0.0
    %527 = vmatpush1.msra.mxu0 %v78
    %528 = vmatprep.subr.mxu0 0.0
    %529 = vmatpush1.msra.mxu0 %v77
    %530 = vmatprep.subr.mxu0 0.0
    %531 = vmatpush1.msra.mxu0 %v76
    %532 = vmatprep.subr.mxu0 0.0
    %533 = vmatpush2.msra.mxu0 0.0
    %534 = vmatprep.subr.mxu0 0.0
    %535 = vmatpush2.msra.mxu0 0.0
    %536 = vmatprep.subr.mxu0 0.0
    %537 = vmatpush2.msra.mxu0 0.0
    %538 = vmatprep.subr.mxu0 0.0
    %539 = vmatpush2.msra.mxu0 0.0
    %540 = vmatprep.subr.mxu0 0.0
    %541 = vmatpush2.msra.mxu0 0.0
    %542 = vmatprep.subr.mxu0 0.0
    %543 = vmatpush2.msra.mxu0 0.0
    %544 = vmatprep.subr.mxu0 0.0
    %545 = vmatpush2.msra.mxu0 0.0
    %546 = vmatprep.subr.mxu0 0.0
    %547 = vmatpush2.msra.mxu0 0.0
    %548 = vmatprep.subr.mxu0 0.0
    %549 = vmatpush2.msra.mxu0 0.0
    %550 = vmatprep.subr.mxu0 0.0
    %551 = vmatpush2.msra.mxu0 0.0
    %552 = vmatprep.subr.mxu0 0.0
    %553 = vmatpush2.msra.mxu0 0.0
    %554 = vmatprep.subr.mxu0 0.0
    %555 = vmatpush2.msra.mxu0 0.0
    %556 = vmatprep.subr.mxu0 0.0
    %557 = vmatpush2.msra.mxu0 0.0
    %558 = vmatprep.subr.mxu0 0.0
    %559 = vmatpush2.msra.mxu0 0.0
    %560 = vmatprep.subr.mxu0 0.0
    %561 = vmatpush2.msra.mxu0 0.0
    %562 = vmatprep.subr.mxu0 0.0
    %563 = vmatpush2.msra.mxu0 0.0
    %564 = vmatprep.mubr.f32.mxu0 0.0
    %565 = vmatmul.mubr.f32.gmra.mxu0 %v495
    %v566 = vpop.f32.mrf.mxu0
    %v567 = vadd.f32 0.0, %v566
    %v568 = vpop.f32.mrf.mxu0
    %569 = vmatprep.mubr.f32.mxu0 0.0
    %570 = vmatmul.mubr.f32.gmra.mxu0 %v498
    %v571 = vpop.f32.mrf.mxu0
    %v572 = vadd.f32 0.0, %v571
    %v573 = vpop.f32.mrf.mxu0
    %574 = vdwg.mxu0
    %v576 = vsel %vm88, %v52, 0
    %v579 = vsel %vm88, %v53, 0
    %581 = vmatprep.subr.mxu0 0.0
    %582 = vmatpush1.msra.mxu0 0.0
    %583 = vmatprep.subr.mxu0 0.0
    %584 = vmatpush1.msra.mxu0 0.0
    %585 = vmatprep.subr.mxu0 0.0
    %586 = vmatpush1.msra.mxu0 0.0
    %587 = vmatprep.subr.mxu0 0.0
    %588 = vmatpush1.msra.mxu0 0.0
    %589 = vmatprep.subr.mxu0 0.0
    %590 = vmatpush1.msra.mxu0 0.0
    %591 = vmatprep.subr.mxu0 0.0
    %592 = vmatpush1.msra.mxu0 0.0
    %593 = vmatprep.subr.mxu0 0.0
    %594 = vmatpush1.msra.mxu0 0.0
    %595 = vmatprep.subr.mxu0 0.0
    %596 = vmatpush1.msra.mxu0 0.0
    %597 = vmatprep.subr.mxu0 0.0
    %598 = vmatpush1.msra.mxu0 0.0
    %599 = vmatprep.subr.mxu0 0.0
    %600 = vmatpush1.msra.mxu0 0.0
    %601 = vmatprep.subr.mxu0 0.0
    %602 = vmatpush1.msra.mxu0 0.0
    %603 = vmatprep.subr.mxu0 0.0
    %604 = vmatpush1.msra.mxu0 0.0
    %605 = vmatprep.subr.mxu0 0.0
    %606 = vmatpush1.msra.mxu0 %v83
    %607 = vmatprep.subr.mxu0 0.0
    %608 = vmatpush1.msra.mxu0 %v82
    %609 = vmatprep.subr.mxu0 0.0
    %610 = vmatpush1.msra.mxu0 %v81
    %611 = vmatprep.subr.mxu0 0.0
    %612 = vmatpush1.msra.mxu0 %v80
    %613 = vmatprep.subr.mxu0 0.0
    %614 = vmatpush2.msra.mxu0 0.0
    %615 = vmatprep.subr.mxu0 0.0
    %616 = vmatpush2.msra.mxu0 0.0
    %617 = vmatprep.subr.mxu0 0.0
    %618 = vmatpush2.msra.mxu0 0.0
    %619 = vmatprep.subr.mxu0 0.0
    %620 = vmatpush2.msra.mxu0 0.0
    %621 = vmatprep.subr.mxu0 0.0
    %622 = vmatpush2.msra.mxu0 0.0
    %623 = vmatprep.subr.mxu0 0.0
    %624 = vmatpush2.msra.mxu0 0.0
    %625 = vmatprep.subr.mxu0 0.0
    %626 = vmatpush2.msra.mxu0 0.0
    %627 = vmatprep.subr.mxu0 0.0
    %628 = vmatpush2.msra.mxu0 0.0
    %629 = vmatprep.subr.mxu0 0.0
    %630 = vmatpush2.msra.mxu0 0.0
    %631 = vmatprep.subr.mxu0 0.0
    %632 = vmatpush2.msra.mxu0 0.0
    %633 = vmatprep.subr.mxu0 0.0
    %634 = vmatpush2.msra.mxu0 0.0
    %635 = vmatprep.subr.mxu0 0.0
    %636 = vmatpush2.msra.mxu0 0.0
    %637 = vmatprep.subr.mxu0 0.0
    %638 = vmatpush2.msra.mxu0 0.0
    %639 = vmatprep.subr.mxu0 0.0
    %640 = vmatpush2.msra.mxu0 0.0
    %641 = vmatprep.subr.mxu0 0.0
    %642 = vmatpush2.msra.mxu0 0.0
    %643 = vmatprep.subr.mxu0 0.0
    %644 = vmatpush2.msra.mxu0 0.0
    %645 = vmatprep.mubr.f32.mxu0 0.0
    %646 = vmatmul.mubr.f32.gmra.mxu0 %v576
    %v647 = vpop.f32.mrf.mxu0
    %v648 = vadd.f32 0.0, %v647
    %v649 = vpop.f32.mrf.mxu0
    %650 = vmatprep.mubr.f32.mxu0 0.0
    %651 = vmatmul.mubr.f32.gmra.mxu0 %v579
    %v652 = vpop.f32.mrf.mxu0
    %v653 = vadd.f32 0.0, %v652
    %v654 = vpop.f32.mrf.mxu0
    %655 = vdwg.mxu0
    %v657 = vsel %vm88, %v54, 0
    %v660 = vsel %vm88, %v55, 0
    %662 = vmatprep.subr.mxu0 0.0
    %663 = vmatpush1.msra.mxu0 0.0
    %664 = vmatprep.subr.mxu0 0.0
    %665 = vmatpush1.msra.mxu0 0.0
    %666 = vmatprep.subr.mxu0 0.0
    %667 = vmatpush1.msra.mxu0 0.0
    %668 = vmatprep.subr.mxu0 0.0
    %669 = vmatpush1.msra.mxu0 0.0
    %670 = vmatprep.subr.mxu0 0.0
    %671 = vmatpush1.msra.mxu0 0.0
    %672 = vmatprep.subr.mxu0 0.0
    %673 = vmatpush1.msra.mxu0 0.0
    %674 = vmatprep.subr.mxu0 0.0
    %675 = vmatpush1.msra.mxu0 0.0
    %676 = vmatprep.subr.mxu0 0.0
    %677 = vmatpush1.msra.mxu0 0.0
    %678 = vmatprep.subr.mxu0 0.0
    %679 = vmatpush1.msra.mxu0 0.0
    %680 = vmatprep.subr.mxu0 0.0
    %681 = vmatpush1.msra.mxu0 0.0
    %682 = vmatprep.subr.mxu0 0.0
    %683 = vmatpush1.msra.mxu0 0.0
    %684 = vmatprep.subr.mxu0 0.0
    %685 = vmatpush1.msra.mxu0 0.0
    %686 = vmatprep.subr.mxu0 0.0
    %687 = vmatpush1.msra.mxu0 %v87
    %688 = vmatprep.subr.mxu0 0.0
    %689 = vmatpush1.msra.mxu0 %v86
    %690 = vmatprep.subr.mxu0 0.0
    %691 = vmatpush1.msra.mxu0 %v85
    %692 = vmatprep.subr.mxu0 0.0
    %693 = vmatpush1.msra.mxu0 %v84
    %694 = vmatprep.subr.mxu0 0.0
    %695 = vmatpush2.msra.mxu0 0.0
    %696 = vmatprep.subr.mxu0 0.0
    %697 = vmatpush2.msra.mxu0 0.0
    %698 = vmatprep.subr.mxu0 0.0
    %699 = vmatpush2.msra.mxu0 0.0
    %700 = vmatprep.subr.mxu0 0.0
    %701 = vmatpush2.msra.mxu0 0.0
    %702 = vmatprep.subr.mxu0 0.0
    %703 = vmatpush2.msra.mxu0 0.0
    %704 = vmatprep.subr.mxu0 0.0
    %705 = vmatpush2.msra.mxu0 0.0
    %706 = vmatprep.subr.mxu0 0.0
    %707 = vmatpush2.msra.mxu0 0.0
    %708 = vmatprep.subr.mxu0 0.0
    %709 = vmatpush2.msra.mxu0 0.0
    %710 = vmatprep.subr.mxu0 0.0
    %711 = vmatpush2.msra.mxu0 0.0
    %712 = vmatprep.subr.mxu0 0.0
    %713 = vmatpush2.msra.mxu0 0.0
    %714 = vmatprep.subr.mxu0 0.0
    %715 = vmatpush2.msra.mxu0 0.0
    %716 = vmatprep.subr.mxu0 0.0
    %717 = vmatpush2.msra.mxu0 0.0
    %718 = vmatprep.subr.mxu0 0.0
    %719 = vmatpush2.msra.mxu0 0.0
    %720 = vmatprep.subr.mxu0 0.0
    %721 = vmatpush2.msra.mxu0 0.0
    %722 = vmatprep.subr.mxu0 0.0
    %723 = vmatpush2.msra.mxu0 0.0
    %724 = vmatprep.subr.mxu0 0.0
    %725 = vmatpush2.msra.mxu0 0.0
    %726 = vmatprep.mubr.f32.mxu0 0.0
    %727 = vmatmul.mubr.f32.gmra.mxu0 %v657
    %v728 = vpop.f32.mrf.mxu0
    %v729 = vadd.f32 0.0, %v728
    %v730 = vpop.f32.mrf.mxu0
    %731 = vmatprep.mubr.f32.mxu0 0.0
    %732 = vmatmul.mubr.f32.gmra.mxu0 %v660
    %v733 = vpop.f32.mrf.mxu0
    %v734 = vadd.f32 0.0, %v733
    %v735 = vpop.f32.mrf.mxu0
    %736 = vdwg.mxu0
    %737 = vst [vmem:[#allocation7] sm:$0xff] %v162
    %738 = vst [vmem:[#allocation7 + $0x8] sm:$0xff] %v167
    %739 = vst [vmem:[#allocation7 + $0x10] sm:$0xff] %v243
    %740 = vst [vmem:[#allocation7 + $0x18] sm:$0xff] %v248
    %741 = vst [vmem:[#allocation7 + $0x20] sm:$0xff] %v324
    %742 = vst [vmem:[#allocation7 + $0x28] sm:$0xff] %v329
    %743 = vst [vmem:[#allocation7 + $0x30] sm:$0xff] %v405
    %744 = vst [vmem:[#allocation7 + $0x38] sm:$0xff] %v410
    %745 = vst [vmem:[#allocation7 + $0x40] sm:$0xff] %v486
    %746 = vst [vmem:[#allocation7 + $0x48] sm:$0xff] %v491
    %747 = vst [vmem:[#allocation7 + $0x50] sm:$0xff] %v567
    %748 = vst [vmem:[#allocation7 + $0x58] sm:$0xff] %v572
    %749 = vst [vmem:[#allocation7 + $0x60] sm:$0xff] %v648
    %750 = vst [vmem:[#allocation7 + $0x68] sm:$0xff] %v653
    %751 = vst [vmem:[#allocation7 + $0x70] sm:$0xff] %v729
    %752 = vst [vmem:[#allocation7 + $0x78] sm:$0xff] %v734
    // Predicated region
    $region18: #{tpu_custom_call.1} parent=1 // pred_check
      _
    $region19: #{tpu_custom_call.1} parent=1 // pred_check_branch
      %754 = sbr.rel (0) target = $region21
    $region20: #{tpu_custom_call.1} parent=1 // pred_region
      %s756 = ssub.s32 2048, 2048
      %757 = vsyncadd [#allocation4], %s756
      %s758 = sshll.u32 [#allocation7], 4
      %s759 = int_to_ptr.vmem [resolvable:$true] %s758
      %764 = dma.vmem_to_hbm [thread:$0]  %s759, 2048, %s2, [#allocation4], 128, 128, 8
    $region21: #{tpu_custom_call.1} parent=1 // pred_fallthru
      _
    // Predicated region
    $region22: #{tpu_custom_call.1} parent=1 // pred_check
      _
    $region23: #{tpu_custom_call.1} parent=1 // pred_check_branch
      %766 = sbr.rel (0) target = $region25
    $region24: #{tpu_custom_call.1} parent=1 // pred_region
      %767 = dma.done [#allocation4], 2048
    $region25: #{tpu_custom_call.1} parent=1 // pred_fallthru
      _
    %768 = vsyncpa [#allocation3], 1
    %769 = vsyncpa [#allocation6], 1
    %770 = vsyncpa [#allocation4], 1

</llo_original>
